<compile_context>
chip_gen: v7x
topology: tpu7x:2x2x1
jax: 0.10.0
libtpu: 0.0.40
codegen_flags: <defaults>
</compile_context>

<pallas_src>
import jax
import jax.numpy as jnp
from jax.experimental import pallas as pl
from jax.experimental.pallas import tpu as pltpu


def _sine_kernel(w0_ref, x_ref, o_ref):
    # w0 is a scalar prefetched into SMEM; x/o are VMEM tiles.
    # Compute in f32 (accurate on all generations incl. v5e, which has no bf16
    # VALU), store in the output dtype (halves HBM bytes for bf16 inputs).
    w0 = w0_ref[0]
    x = x_ref[...].astype(jnp.float32)
    o_ref[...] = jnp.sin(w0 * x).astype(o_ref.dtype)


# itemsize -> minimum sublane multiple for the second-to-last block dim
_SUBLANE = {1: 32, 2: 16, 4: 8}


def sine(x: jax.Array, w0: float = 1.0) -> jax.Array:
    """Elementwise sin(w0 * x). Accepts any shape/float dtype; NCHW in tests."""
    orig_shape = x.shape
    dtype = x.dtype
    n = x.size
    itemsize = dtype.itemsize
    sub = _SUBLANE.get(itemsize, 8)

    # ---- Fast path: pick the widest lane-dense column count that divides n.
    cols = None
    for c in (1024, 512, 256, 128):
        if n % c == 0:
            cols = c
            break

    if cols is not None:
        # Pure reshape (bitcast) — no pad, no slice epilogue.
        x2d = x.reshape(n // cols, cols)
        padded = False
    else:
        # Slow path: pad flat array up to a (sublane*128)-aligned length.
        cols = 128
        chunk = cols * sub
        padded_n = pl.cdiv(n, chunk) * chunk
        x_flat = jnp.pad(jnp.ravel(x), (0, padded_n - n))
        x2d = x_flat.reshape(padded_n // cols, cols)
        padded = True

    rows = x2d.shape[0]

    # ---- Block sizing: ~2 MiB per block. With 1 input + 1 output, double
    # buffered, that is ~8 MiB of VMEM — comfortably inside the default scoped
    # VMEM on v5e (16 MiB), v6e (32 MiB) and v7x (32 MiB of 64 MiB physical),
    # while keeping per-grid-step overhead (~0.35 us) negligible.
    target_block_bytes = 2 * 1024 * 1024
    tile_rows = max(sub, (target_block_bytes // (cols * itemsize)) // sub * sub)
    if tile_rows >= rows:
        # Single full-extent block (full array dims are always a legal block).
        tile_rows = rows
        grid = (1,)
    else:
        # cdiv grid: Pallas handles the ragged last block; no tile-halving
        # fallback that would shrink blocks to 4 KiB for awkward row counts.
        grid = (pl.cdiv(rows, tile_rows),)

    w0_arr = jnp.array([w0], dtype=jnp.float32)

    out2d = pl.pallas_call(
        _sine_kernel,
        out_shape=jax.ShapeDtypeStruct((rows, cols), dtype),
        grid_spec=pltpu.PrefetchScalarGridSpec(
            num_scalar_prefetch=1,
            grid=grid,
            in_specs=[
                pl.BlockSpec((tile_rows, cols), lambda i, w0: (i, 0)),
            ],
            out_specs=pl.BlockSpec((tile_rows, cols), lambda i, w0: (i, 0)),
        ),
        compiler_params=pltpu.CompilerParams(
            # Independent row tiles: shardable across the 2 TensorCores on v7x.
            dimension_semantics=("parallel",),
        ),
    )(w0_arr, x2d)

    if padded:
        out = out2d.reshape(-1)[:n].reshape(orig_shape)
    else:
        out = out2d.reshape(orig_shape)
    return out


if __name__ == "__main__":
    key = jax.random.PRNGKey(0)
    # Small NCHW input consistent with typical SIREN conv usage.
    x = jax.random.normal(key, (2, 4, 16, 16), dtype=jnp.float32)
    w0 = 30.0  # common SIREN first-layer frequency; module default is 1.0

    y = sine(x, w0=w0)
    y = jax.block_until_ready(y)

    # Reference check in plain JAX.
    y_ref = jnp.sin(w0 * x)
    assert y.shape == x.shape and y.dtype == x.dtype
    assert jnp.allclose(y, y_ref, atol=1e-5, rtol=1e-5), "mismatch vs reference"

    # Also exercise the padded slow path and a bf16 input once for coverage.
    x_odd = jax.random.normal(jax.random.PRNGKey(1), (3, 5, 7), dtype=jnp.float32)
    y_odd = jax.block_until_ready(sine(x_odd, w0=2.0))
    assert jnp.allclose(y_odd, jnp.sin(2.0 * x_odd), atol=1e-5, rtol=1e-5)

    x_bf16 = x.astype(jnp.bfloat16)
    y_bf16 = jax.block_until_ready(sine(x_bf16, w0=w0))
    assert y_bf16.dtype == jnp.bfloat16
    assert jnp.allclose(
        y_bf16.astype(jnp.float32),
        jnp.sin(w0 * x_bf16.astype(jnp.float32)),
        atol=2e-2, rtol=2e-2,
    )

    print("KERNEL_OK")
</pallas_src>

<mosaic_0001>
module attributes {stable_mosaic.version = 11 : i64} {
  func.func @_sine_kernel(%arg0: i32, %arg1: memref<1xf32, #tpu.memory_space<smem>>, %arg2: memref<2x1024xf32, #tpu.memory_space<vmem>>, %arg3: memref<2x1024xf32, #tpu.memory_space<vmem>>) attributes {dimension_semantics = [#tpu.dimension_semantics<parallel>], iteration_bounds = array<i64: 1>, scalar_prefetch = 1 : i64, scratch_operands = 0 : i64, tpu.core_type = #tpu.core_type<tc>, window_params = [{transform_indices = @transform_0, window_bounds = array<i64: 2, 1024>}, {transform_indices = @transform_1, window_bounds = array<i64: 2, 1024>}]} {
    %c0 = arith.constant 0 : index
    %0 = memref.load %arg1[%c0] : memref<1xf32, #tpu.memory_space<smem>>
    %c0_0 = arith.constant 0 : index
    %c0_1 = arith.constant 0 : index
    %1 = vector.load %arg2[%c0_0, %c0_1] : memref<2x1024xf32, #tpu.memory_space<vmem>>, vector<2x1024xf32>
    %2 = vector.broadcast %0 : f32 to vector<2x1024xf32>
    %3 = arith.mulf %2, %1 : vector<2x1024xf32>
    %4 = math.sin %3 : vector<2x1024xf32>
    %c0_2 = arith.constant 0 : index
    %c0_3 = arith.constant 0 : index
    %5 = vector.load %arg3[%c0_2, %c0_3] : memref<2x1024xf32, #tpu.memory_space<vmem>>, vector<2x1024xf32>
    tpu.vector_store %arg3[%c0_2, %c0_3], %4 {strides = array<i32>} : memref<2x1024xf32, #tpu.memory_space<vmem>>, vector<2x1024xf32>,
    return
  }
  func.func @transform_0(%arg0: i32, %arg1: memref<1xf32, #tpu.memory_space<smem>>) -> (i32, i32) {
    %c0_i32 = arith.constant 0 : i32
    %c0_i32_0 = arith.constant 0 : i32
    return %arg0, %c0_i32 : i32, i32
  }
  func.func @transform_1(%arg0: i32, %arg1: memref<1xf32, #tpu.memory_space<smem>>) -> (i32, i32) {
    %c0_i32 = arith.constant 0 : i32
    %c0_i32_0 = arith.constant 0 : i32
    return %arg0, %c0_i32 : i32, i32
  }
}

</mosaic_0001>

<llo_original>
// kernel: tpu_custom_call.1
$region0: #{tpu_custom_call.1}
  #allocation0 [shape = 'u32[]', space=smem, size = 0x4, offset = 0x4, fixed_abs, tag = 'smem constant byte address 0x4 - core index']
  #allocation1 [shape = 'u32[144,128]{1,0:T(1,128)}', space=vmem, size = 0x12000, scoped, tag = 'internal scratch']
  #allocation2 [shape = 's32[1]{0}', space=sflag, size = 0x4, scoped, tag = 'scoped memory for tpu_custom_call.1']
  #allocation3 [shape = 'f32[1]{0:T(128)S(6)}', space=smem, size = 0x200, scoped, tag = 'prefetched SMEM operand 0']
  %s0 = inlined_call_operand.<no memory space> [shape: f32[1], index: 0, kind: input, shape index: {}]
  %s1 = inlined_call_operand.hbm [shape: f32[2,1024], index: 1, kind: input, shape index: {}]
  %s2 = inlined_call_operand.hbm [shape: f32[2,1024], index: 2, kind: output, shape index: {}]
  %s3 = sld [smem:[#allocation0]]
  $region18: #{tpu_custom_call.1} parent=0
    _
  %s5 = ssub.s32 1, %s3
  %s6 = scalar_select 0, %s5, %s3
  %7 = sst [smem:[#allocation3]] %s0
  $region1: #{tpu_custom_call.1} parent=0
    #allocation4 [shape = 'u8[8192]{0}', space=vmem, size = 0x2000, scoped, tag = 'input window, operand 1, single buffered']
    #allocation5 [shape = 's32[1]{0}', space=sflag, size = 0x4, scoped, tag = 'scoped memory for tpu_custom_call.1']
    #allocation6 [shape = 's32[1]{0}', space=sflag, size = 0x4, scoped, tag = 'scoped memory for tpu_custom_call.1']
    #allocation7 [shape = 'u8[8192]{0}', space=vmem, size = 0x2000, scoped, tag = 'output window, operand 0, single buffered']
    %8 = vsyncpa [#allocation5], 0
    %9 = vsyncpa [#allocation6], 0
    // Predicated region
    $region2: #{tpu_custom_call.1} parent=1 // pred_check
      _
    $region3: #{tpu_custom_call.1} parent=1 // pred_check_branch
      %11 = sbr.rel (0) target = $region5
    $region4: #{tpu_custom_call.1} parent=1 // pred_region
      %s13 = ssub.s32 256, 256
      %14 = vsyncadd [#allocation5], %s13
      %s16 = sshll.u32 [#allocation4], 4
      %s17 = int_to_ptr.vmem [resolvable:$true] %s16
      %19 = dma.hbm_to_vmem [thread:$0]  %s1, 256, %s17, [#allocation5]
    $region5: #{tpu_custom_call.1} parent=1 // pred_fallthru
      _
    // Predicated region
    $region6: #{tpu_custom_call.1} parent=1 // pred_check
      _
    $region7: #{tpu_custom_call.1} parent=1 // pred_check_branch
      %21 = sbr.rel (0) target = $region9
    $region8: #{tpu_custom_call.1} parent=1 // pred_region
      %22 = dma.done [#allocation5], 256
    $region9: #{tpu_custom_call.1} parent=1 // pred_fallthru
      _
    %s23 = sld [smem:[#allocation3]]
    %v24 = vld [vmem:[#allocation4] sm:$0xff]
    %v25 = vld [vmem:[#allocation4 + $0x8] sm:$0xff]
    %v26 = vstv %s23
    %v27 = vmul.f32 %v26, %v24
    %v28 = vmul.f32 %v26, %v25
    %v29 = vand.u32 2147483647, %v27
    %vm30 = vcmp.le.f32.partialorder %v29, 0.7853982
    %vm31 = vcmp.lt.s32.totalorder %v27, 0
    %v32 = vand.u32 %v27, 2139095040
    %v33 = vshrl.u32 %v32, 23
    %v34 = vsub.s32 %v33, 127
    %v35 = vand.u32 2147483647, %v27
    %v36 = vand.u32 %v35, 8388607
    %v37 = vor.u32 %v36, 8388608
    %v38 = vsub.s32 0, %v37
    %v39 = vadd.s32 %v34, 1
    %vm40 = vcmp.gt.s32.totalorder %v39, 0
    %v41 = vsel %vm40, %v39, 0
    %v42 = vshrl.u32 %v41, 5
    %v43 = vand.u32 %v41, 31
    %v44 = vsub.s32 32, %v43
    %v45 = vshrl.u32 683565275, %v44
    %v46 = vshll.u32 683565275, %v43
    %v47 = vshrl.u32 2475754826, %v44
    %v48 = vor.u32 %v46, %v47
    %v49 = vshll.u32 2475754826, %v43
    %v50 = vshrl.u32 2131351028, %v44
    %v51 = vor.u32 %v49, %v50
    %v52 = vshll.u32 2131351028, %v43
    %v53 = vshrl.u32 2102212464, %v44
    %v54 = vor.u32 %v52, %v53
    %v55 = vshll.u32 2102212464, %v43
    %v56 = vshrl.u32 920167782, %v44
    %v57 = vor.u32 %v55, %v56
    %v58 = vshll.u32 920167782, %v43
    %v59 = vshrl.u32 1326507024, %v44
    %v60 = vor.u32 %v58, %v59
    %vm61 = vcmp.lt.s32.totalorder %v42, 1
    %vm62 = vcmp.lt.s32.totalorder %v42, 2
    %vm63 = vcmp.lt.s32.totalorder %v42, 3
    %vm64 = vcmp.lt.s32.totalorder %v42, 4
    %v65 = vsel %vm61, %v45, %v48
    %v66 = vsel %vm64, %v54, 2102212464
    %v67 = vsel %vm63, %v51, %v66
    %v68 = vsel %vm62, %v65, %v67
    %v69 = vsel %vm61, %v48, %v51
    %v70 = vsel %vm64, %v57, 920167782
    %v71 = vsel %vm63, %v54, %v70
    %v72 = vsel %vm62, %v69, %v71
    %v73 = vsel %vm61, %v51, %v54
    %v74 = vsel %vm64, %v60, 1326507024
    %v75 = vsel %vm63, %v57, %v74
    %v76 = vsel %vm62, %v73, %v75
    %v77 = vshll.u32 %v37, 8
    %v78 = vmul.u32.u64.compose %v77, %v76
    %v79 = vextract.low.u32 %v78
    %v80 = vextract.high.u32 %v78
    %v81 = vmul.u32.u64.compose %v77, %v72
    %v82 = vextract.low.u32 %v81
    %v83 = vextract.high.u32 %v81
    %v84 = vmul.u32 %v77, %v68
    %v85 = vadd.s32 %v80, %v82
    %vm86 = vc.u32 %v80, %v82
    %v87 = vadd.s32 %v83, 1
    %v88 = vsel %vm86, %v87, %v83
    %v89 = vadd.s32 %v84, %v88
    %v90 = vadd.s32 %v89, 536870912
    %v91 = vshrl.u32 %v90, 30
    %v92 = vshll.u32 %v91, 30
    %v93 = vsub.s32 %v89, %v92
    %vm94 = vcmp.lt.s32.totalorder %v93, 0
    %v95 = vsub.s32 0, %v93
    %v96 = vsel %vm94, %v95, %v93
    %v97 = vclz %v96
    %v98 = vsub.s32 %v97, 2
    %vm99 = vcmp.gt.s32.totalorder 0, %v98
    %v100 = vsel %vm99, 0, %v98
    %v101 = vsub.s32 32, %v100
    %v102 = vshll.u32 %v93, %v100
    %v103 = vshrl.u32 %v85, %v101
    %v104 = vor.u32 %v102, %v103
    %v105 = vsub.s32 4294967266, %v100
    %v106 = vadd.s32 %v105, 127
    %v107 = vshll.u32 %v106, 23
    %v108 = vor.u32 4788187, %v107
    %v109 = vand.u32 2147483647, %v108
    %v111 = vcvt.s32.f32 %v104
    %v112 = vmul.f32 %v111, %v109
    %v113 = vxor.u32 %v112, 2147483648
    %v114 = vsel %vm31, %v113, %v112
    %v115 = vsub.s32 4, %v91
    %v116 = vsel %vm31, %v115, %v91
    %v117 = vsel %vm30, %v27, %v114
    %v118 = vsel %vm30, 0, %v116
    %v119 = vcosq.f32.pop %v117
    %v120 = vsinq.f32.pop %v117
    %vm121 = vweird.f32 %v27
    %v122 = vadd.s32 %v118, 3
    %v123 = vand.u32 %v122, 3
    %vm124 = vcmp.lt.s32.totalorder %v123, 2
    %vm125 = vcmp.eq.s32.totalorder %v123, 0
    %v126 = vxor.u32 %v120, 2147483648
    %v127 = vsel %vm125, %v119, %v126
    %vm128 = vcmp.eq.s32.totalorder %v123, 2
    %v129 = vxor.u32 %v119, 2147483648
    %v130 = vsel %vm128, %v129, %v120
    %v131 = vsel %vm124, %v127, %v130
    %v132 = vsel %vm121, nan, %v131
    %v133 = vand.u32 2147483647, %v28
    %vm134 = vcmp.le.f32.partialorder %v133, 0.7853982
    %vm135 = vcmp.lt.s32.totalorder %v28, 0
    %v136 = vand.u32 %v28, 2139095040
    %v137 = vshrl.u32 %v136, 23
    %v138 = vsub.s32 %v137, 127
    %v139 = vand.u32 2147483647, %v28
    %v140 = vand.u32 %v139, 8388607
    %v141 = vor.u32 %v140, 8388608
    %v142 = vsub.s32 0, %v141
    %v143 = vadd.s32 %v138, 1
    %vm144 = vcmp.gt.s32.totalorder %v143, 0
    %v145 = vsel %vm144, %v143, 0
    %v146 = vshrl.u32 %v145, 5
    %v147 = vand.u32 %v145, 31
    %v148 = vsub.s32 32, %v147
    %v149 = vshrl.u32 683565275, %v148
    %v150 = vshll.u32 683565275, %v147
    %v151 = vshrl.u32 2475754826, %v148
    %v152 = vor.u32 %v150, %v151
    %v153 = vshll.u32 2475754826, %v147
    %v154 = vshrl.u32 2131351028, %v148
    %v155 = vor.u32 %v153, %v154
    %v156 = vshll.u32 2131351028, %v147
    %v157 = vshrl.u32 2102212464, %v148
    %v158 = vor.u32 %v156, %v157
    %v159 = vshll.u32 2102212464, %v147
    %v160 = vshrl.u32 920167782, %v148
    %v161 = vor.u32 %v159, %v160
    %v162 = vshll.u32 920167782, %v147
    %v163 = vshrl.u32 1326507024, %v148
    %v164 = vor.u32 %v162, %v163
    %vm165 = vcmp.lt.s32.totalorder %v146, 1
    %vm166 = vcmp.lt.s32.totalorder %v146, 2
    %vm167 = vcmp.lt.s32.totalorder %v146, 3
    %vm168 = vcmp.lt.s32.totalorder %v146, 4
    %v169 = vsel %vm165, %v149, %v152
    %v170 = vsel %vm168, %v158, 2102212464
    %v171 = vsel %vm167, %v155, %v170
    %v172 = vsel %vm166, %v169, %v171
    %v173 = vsel %vm165, %v152, %v155
    %v174 = vsel %vm168, %v161, 920167782
    %v175 = vsel %vm167, %v158, %v174
    %v176 = vsel %vm166, %v173, %v175
    %v177 = vsel %vm165, %v155, %v158
    %v178 = vsel %vm168, %v164, 1326507024
    %v179 = vsel %vm167, %v161, %v178
    %v180 = vsel %vm166, %v177, %v179
    %v181 = vshll.u32 %v141, 8
    %v182 = vmul.u32.u64.compose %v181, %v180
    %v183 = vextract.low.u32 %v182
    %v184 = vextract.high.u32 %v182
    %v185 = vmul.u32.u64.compose %v181, %v176
    %v186 = vextract.low.u32 %v185
    %v187 = vextract.high.u32 %v185
    %v188 = vmul.u32 %v181, %v172
    %v189 = vadd.s32 %v184, %v186
    %vm190 = vc.u32 %v184, %v186
    %v191 = vadd.s32 %v187, 1
    %v192 = vsel %vm190, %v191, %v187
    %v193 = vadd.s32 %v188, %v192
    %v194 = vadd.s32 %v193, 536870912
    %v195 = vshrl.u32 %v194, 30
    %v196 = vshll.u32 %v195, 30
    %v197 = vsub.s32 %v193, %v196
    %vm198 = vcmp.lt.s32.totalorder %v197, 0
    %v199 = vsub.s32 0, %v197
    %v200 = vsel %vm198, %v199, %v197
    %v201 = vclz %v200
    %v202 = vsub.s32 %v201, 2
    %vm203 = vcmp.gt.s32.totalorder 0, %v202
    %v204 = vsel %vm203, 0, %v202
    %v205 = vsub.s32 32, %v204
    %v206 = vshll.u32 %v197, %v204
    %v207 = vshrl.u32 %v189, %v205
    %v208 = vor.u32 %v206, %v207
    %v209 = vsub.s32 4294967266, %v204
    %v210 = vadd.s32 %v209, 127
    %v211 = vshll.u32 %v210, 23
    %v212 = vor.u32 4788187, %v211
    %v213 = vand.u32 2147483647, %v212
    %v215 = vcvt.s32.f32 %v208
    %v216 = vmul.f32 %v215, %v213
    %v217 = vxor.u32 %v216, 2147483648
    %v218 = vsel %vm135, %v217, %v216
    %v219 = vsub.s32 4, %v195
    %v220 = vsel %vm135, %v219, %v195
    %v221 = vsel %vm134, %v28, %v218
    %v222 = vsel %vm134, 0, %v220
    %v223 = vcosq.f32.pop %v221
    %v224 = vsinq.f32.pop %v221
    %vm225 = vweird.f32 %v28
    %v226 = vadd.s32 %v222, 3
    %v227 = vand.u32 %v226, 3
    %vm228 = vcmp.lt.s32.totalorder %v227, 2
    %vm229 = vcmp.eq.s32.totalorder %v227, 0
    %v230 = vxor.u32 %v224, 2147483648
    %v231 = vsel %vm229, %v223, %v230
    %vm232 = vcmp.eq.s32.totalorder %v227, 2
    %v233 = vxor.u32 %v223, 2147483648
    %v234 = vsel %vm232, %v233, %v224
    %v235 = vsel %vm228, %v231, %v234
    %v236 = vsel %vm225, nan, %v235
    %237 = vst [vmem:[#allocation7] sm:$0xff] %v132
    %238 = vst [vmem:[#allocation7 + $0x8] sm:$0xff] %v236
    // Predicated region
    $region10: #{tpu_custom_call.1} parent=1 // pred_check
      _
    $region11: #{tpu_custom_call.1} parent=1 // pred_check_branch
      %240 = sbr.rel (0) target = $region13
    $region12: #{tpu_custom_call.1} parent=1 // pred_region
      %s242 = ssub.s32 256, 256
      %243 = vsyncadd [#allocation6], %s242
      %s245 = sshll.u32 [#allocation7], 4
      %s246 = int_to_ptr.vmem [resolvable:$true] %s245
      %248 = dma.vmem_to_hbm [thread:$0]  %s246, 256, %s2, [#allocation6]
    $region13: #{tpu_custom_call.1} parent=1 // pred_fallthru
      _
    // Predicated region
    $region14: #{tpu_custom_call.1} parent=1 // pred_check
      _
    $region15: #{tpu_custom_call.1} parent=1 // pred_check_branch
      %250 = sbr.rel (0) target = $region17
    $region16: #{tpu_custom_call.1} parent=1 // pred_region
      %251 = dma.done [#allocation6], 256
    $region17: #{tpu_custom_call.1} parent=1 // pred_fallthru
      _
    %252 = vsyncpa [#allocation5], 1
    %253 = vsyncpa [#allocation6], 1

</llo_original>
